<compile_context>
chip_gen: v7x
topology: tpu7x:2x2x1
jax: 0.10.0
libtpu: 0.0.40
codegen_flags: <defaults>
</compile_context>

<pallas_src>
import functools

import jax
import jax.numpy as jnp
from jax import lax
from jax.experimental import pallas as pl
from jax.experimental.pallas import tpu as pltpu


def _mha_kernel(x_ref, wqkv_ref, bqkv_ref, wp_ref, bp_ref, o_ref, *,
                num_heads, head_size, q_tile):
    """One (batch, query-tile) pair per grid step.

    x_ref    : (1, T, C)   bf16  full sequence (needed for K/V)
    wqkv_ref : (C, 3C)     bf16  fused Q/K/V weight    bqkv_ref : (1, 3C) f32
    wp_ref   : (C, C)      bf16  output projection     bp_ref   : (1, C)  f32
    o_ref    : (1, tq, C)  output dtype
    """
    H, hs, tq = num_heads, head_size, q_tile
    T = x_ref.shape[1]
    C = H * hs

    q_start = pl.program_id(1) * tq              # query-tile row offset

    x_full = x_ref[0]                            # (T, C) bf16
    wqkv = wqkv_ref[...]                         # (C, 3C) bf16
    bqkv = bqkv_ref[...]                         # (1, 3C) f32

    # ---- fused QKV projection (bf16 in, f32 accumulate on the MXU) --------
    if tq == T:                                  # single query tile: fully fused
        qkv = jnp.dot(x_full, wqkv, preferred_element_type=jnp.float32) + bqkv
        q = qkv[:, :C]                           # (tq, C) f32
        k = qkv[:, C:2 * C]                      # (T, C)  f32
        v = qkv[:, 2 * C:]
    else:
        # Q only for this query tile; K/V (fused) for the whole sequence.
        x_q = x_ref[0, pl.ds(pl.multiple_of(q_start, tq), tq), :]   # (tq, C)
        q = jnp.dot(x_q, wqkv[:, :C],
                    preferred_element_type=jnp.float32) + bqkv[:, :C]
        kv = jnp.dot(x_full, wqkv[:, C:],
                     preferred_element_type=jnp.float32) + bqkv[:, C:]
        k = kv[:, :C]
        v = kv[:, C:]

    # ---- head-batched attention (heads on the leading, non-lane axis) -----
    q = q.astype(jnp.bfloat16)
    k = k.astype(jnp.bfloat16)
    v = v.astype(jnp.bfloat16)
    q3 = jnp.stack([q[:, h * hs:(h + 1) * hs] for h in range(H)], axis=0)  # (H, tq, hs)
    k3 = jnp.stack([k[:, h * hs:(h + 1) * hs] for h in range(H)], axis=0)  # (H, T,  hs)
    v3 = jnp.stack([v[:, h * hs:(h + 1) * hs] for h in range(H)], axis=0)  # (H, T,  hs)

    scale = jnp.float32(hs) ** -0.5
    s = jnp.einsum('hqd,hkd->hqk', q3, k3,
                   preferred_element_type=jnp.float32) * scale             # (H, tq, T)

    # Causal mask, offset by the query-tile start; large finite negative
    # (bf16-safe) instead of -inf.
    row = q_start + lax.broadcasted_iota(jnp.int32, (H, tq, T), 1)
    col = lax.broadcasted_iota(jnp.int32, (H, tq, T), 2)
    s = jnp.where(row >= col, s, jnp.float32(-1e30))

    # Softmax in f32; divide via EUP approx reciprocal.
    m = jnp.max(s, axis=-1, keepdims=True)
    p = jnp.exp(s - m)
    l = jnp.sum(p, axis=-1, keepdims=True)
    inv_l = pl.reciprocal(l, approx=True)                                  # (H, tq, 1)
    # attn_dropout is identity (p = 0 / eval)
    # TODO(synk): training-mode dropout (p > 0) would need pltpu.prng_seed /
    # pltpu.prng_random_bits; not part of the eval forward pass.

    y3 = jnp.einsum('hqk,hkd->hqd', p.astype(jnp.bfloat16), v3,
                    preferred_element_type=jnp.float32) * inv_l            # (H, tq, hs)

    # Concat heads back to (tq, C) == PyTorch .transpose(1, 2).view(B, T, C).
    y = jnp.concatenate([y3[h] for h in range(H)], axis=-1)                # (tq, C) f32

    # ---- output projection -------------------------------------------------
    out = jnp.dot(y.astype(jnp.bfloat16), wp_ref[...],
                  preferred_element_type=jnp.float32) + bp_ref[...]
    # resid_dropout is identity (p = 0 / eval)
    o_ref[0] = out.astype(o_ref.dtype)


def multi_head_attention(x, params, *, num_heads, q_tile=None):
    """x: (B, T, C).  params: dict of pre-transposed ([in, out]) weights/biases."""
    B, T, C = x.shape
    assert C % num_heads == 0
    head_size = C // num_heads

    if q_tile is None:
        q_tile = T if T <= 128 else 128
    assert T % q_tile == 0, "sequence length must be a multiple of the query tile"
    nq = T // q_tile

    # Fused QKV weight/bias.  Matmul operands in bf16 (halves HBM traffic,
    # bf16-native MXU); biases stay f32 and are added to the f32 accumulator.
    wqkv = jnp.concatenate([params["wq"], params["wk"], params["wv"]],
                           axis=1).astype(jnp.bfloat16)            # (C, 3C)
    bqkv = jnp.concatenate([params["bq"], params["bk"], params["bv"]],
                           axis=1).astype(jnp.float32)             # (1, 3C)
    wp = params["wp"].astype(jnp.bfloat16)                         # (C, C)
    bp = params["bp"].astype(jnp.float32)                          # (1, C)
    x_bf = x.astype(jnp.bfloat16)

    kernel = functools.partial(_mha_kernel, num_heads=num_heads,
                               head_size=head_size, q_tile=q_tile)

    # VMEM budget from actual tile sizes (double-buffered inputs/outputs plus
    # in-kernel intermediates), clamped to fit v7x's 64 MiB.
    bf16, f32 = 2, 4
    H, hs = num_heads, head_size
    est = (2 * (C * 3 * C + C * C) * bf16            # weights (x2 pipeline buffers)
           + 2 * 4 * C * f32                         # biases
           + 2 * (T * C * bf16 + q_tile * C * f32)   # x in / out tiles
           + T * 3 * C * f32                         # fused qkv
           + 3 * H * T * hs * bf16                   # q3/k3/v3
           + 2 * H * q_tile * T * f32                # scores + probs
           + H * q_tile * hs * f32 + 2 * q_tile * C * f32)
    vmem_limit = max(32 * 1024 * 1024, min(2 * est, 64 * 1024 * 1024))

    return pl.pallas_call(
        kernel,
        out_shape=jax.ShapeDtypeStruct((B, T, C), x.dtype),
        grid_spec=pltpu.PrefetchScalarGridSpec(
            num_scalar_prefetch=0,
            grid=(B, nq),
            in_specs=[
                pl.BlockSpec((1, T, C), lambda b, qi: (b, 0, 0)),   # x (full seq, revisited)
                pl.BlockSpec((C, 3 * C), lambda b, qi: (0, 0)),     # fused QKV weight
                pl.BlockSpec((1, 3 * C), lambda b, qi: (0, 0)),     # fused QKV bias
                pl.BlockSpec((C, C), lambda b, qi: (0, 0)),         # proj weight
                pl.BlockSpec((1, C), lambda b, qi: (0, 0)),         # proj bias
            ],
            out_specs=pl.BlockSpec((1, q_tile, C), lambda b, qi: (b, qi, 0)),
        ),
        compiler_params=pltpu.CompilerParams(
            dimension_semantics=("parallel", "parallel"),
            vmem_limit_bytes=vmem_limit),
    )(x_bf, wqkv, bqkv, wp, bp)


def _reference(x, params, num_heads):
    """Pure-JAX f32 reference mirroring the PyTorch forward (dropout = identity)."""
    B, T, C = x.shape
    hs = C // num_heads
    q = x @ params["wq"] + params["bq"]
    k = x @ params["wk"] + params["bk"]
    v = x @ params["wv"] + params["bv"]
    q = q.reshape(B, T, num_heads, hs).transpose(0, 2, 1, 3)
    k = k.reshape(B, T, num_heads, hs).transpose(0, 2, 1, 3)
    v = v.reshape(B, T, num_heads, hs).transpose(0, 2, 1, 3)
    attn = jnp.einsum("bhqd,bhkd->bhqk", q, k) * hs ** -0.5
    mask = jnp.tril(jnp.ones((T, T), bool))
    attn = jnp.where(mask[None, None], attn, -jnp.inf)
    attn = jax.nn.softmax(attn, axis=-1)
    y = jnp.einsum("bhqk,bhkd->bhqd", attn, v)
    y = y.transpose(0, 2, 1, 3).reshape(B, T, C)
    return y @ params["wp"] + params["bp"]


def init_params(key, embedding_dim):
    """Deterministic parameter init (weights stored as [in, out])."""
    C = embedding_dim
    keys = jax.random.split(key, 8)
    scale = 1.0 / jnp.sqrt(C)

    def lin(kw, kb):
        w = jax.random.uniform(kw, (C, C), jnp.float32, -scale, scale)
        b = jax.random.uniform(kb, (1, C), jnp.float32, -scale, scale)
        return w, b

    wq, bq = lin(keys[0], keys[1])
    wk, bk = lin(keys[2], keys[3])
    wv, bv = lin(keys[4], keys[5])
    wp, bp = lin(keys[6], keys[7])
    return dict(wq=wq, bq=bq, wk=wk, bk=bk, wv=wv, bv=bv, wp=wp, bp=bp)


if __name__ == "__main__":
    # Small shapes consistent with the module: B=2, T=block_size=8,
    # embedding_dim=32, num_heads=4 (head_size=8), dropout=0.0.
    B, T, C, H = 2, 8, 32, 4

    key = jax.random.PRNGKey(0)
    kx, kp = jax.random.split(key)
    x = jax.random.normal(kx, (B, T, C), jnp.float32)
    params = init_params(kp, C)

    out = multi_head_attention(x, params, num_heads=H)
    out = jax.block_until_ready(out)

    ref = _reference(x, params, H)
    assert out.shape == (B, T, C)
    # bf16 matmul inputs + EUP approx reciprocal -> relaxed tolerance vs f32 ref.
    max_err = float(jnp.max(jnp.abs(out - ref)))
    assert jnp.allclose(out, ref, atol=5e-2, rtol=5e-2), max_err

    print("KERNEL_OK")
</pallas_src>

<mosaic_0001>
module attributes {stable_mosaic.version = 11 : i64} {
  func.func @_mha_kernel(%arg0: i32, %arg1: i32, %arg2: memref<1x8x32xbf16, #tpu.memory_space<vmem>>, %arg3: memref<32x96xbf16, #tpu.memory_space<vmem>>, %arg4: memref<1x96xf32, #tpu.memory_space<vmem>>, %arg5: memref<32x32xbf16, #tpu.memory_space<vmem>>, %arg6: memref<1x32xf32, #tpu.memory_space<vmem>>, %arg7: memref<1x8x32xf32, #tpu.memory_space<vmem>>) attributes {dimension_semantics = [#tpu.dimension_semantics<parallel>, #tpu.dimension_semantics<parallel>], iteration_bounds = array<i64: 2, 1>, scalar_prefetch = 0 : i64, scratch_operands = 0 : i64, tpu.core_type = #tpu.core_type<tc>, window_params = [{transform_indices = @transform_0, window_bounds = array<i64: 1, 8, 32>}, {pipeline_mode = #tpu.pipeline_mode<synchronous>, transform_indices = @transform_1, window_bounds = array<i64: 32, 96>}, {pipeline_mode = #tpu.pipeline_mode<synchronous>, transform_indices = @transform_2, window_bounds = array<i64: 1, 96>}, {pipeline_mode = #tpu.pipeline_mode<synchronous>, transform_indices = @transform_3, window_bounds = array<i64: 32, 32>}, {pipeline_mode = #tpu.pipeline_mode<synchronous>, transform_indices = @transform_4, window_bounds = array<i64: 1, 32>}, {transform_indices = @transform_5, window_bounds = array<i64: 1, 8, 32>}]} {
    %c8_i32 = arith.constant 8 : i32
    %0 = arith.muli %arg1, %c8_i32 : i32
    %c0 = arith.constant 0 : index
    %c0_0 = arith.constant 0 : index
    %c0_1 = arith.constant 0 : index
    %1 = vector.load %arg2[%c0, %c0_0, %c0_1] : memref<1x8x32xbf16, #tpu.memory_space<vmem>>, vector<1x8x32xbf16>
    %2 = vector.shape_cast %1 : vector<1x8x32xbf16> to vector<8x32xbf16>
    %c0_2 = arith.constant 0 : index
    %c0_3 = arith.constant 0 : index
    %3 = vector.load %arg3[%c0_2, %c0_3] : memref<32x96xbf16, #tpu.memory_space<vmem>>, vector<32x96xbf16>
    %c0_4 = arith.constant 0 : index
    %c0_5 = arith.constant 0 : index
    %4 = vector.load %arg4[%c0_4, %c0_5] : memref<1x96xf32, #tpu.memory_space<vmem>>, vector<1x96xf32>
    %cst = arith.constant dense<0.000000e+00> : vector<8x96xf32>
    %5 = tpu.matmul %2, %3, %cst {dimension_numbers = #tpu.dot_dimension_numbers<[1], [0], [0], [1], [0, 0, 1, 1], [], []>} : vector<8x32xbf16>, vector<32x96xbf16>, vector<8x96xf32> -> vector<8x96xf32>
    %6 = vector.broadcast %4 : vector<1x96xf32> to vector<8x96xf32>
    %7 = arith.addf %5, %6 : vector<8x96xf32>
    %8 = vector.extract_strided_slice %7 {offsets = [0, 0], sizes = [8, 32], strides = [1, 1]} : vector<8x96xf32> to vector<8x32xf32>
    %9 = vector.extract_strided_slice %7 {offsets = [0, 32], sizes = [8, 32], strides = [1, 1]} : vector<8x96xf32> to vector<8x32xf32>
    %10 = vector.extract_strided_slice %7 {offsets = [0, 64], sizes = [8, 32], strides = [1, 1]} : vector<8x96xf32> to vector<8x32xf32>
    %11 = arith.truncf %8 : vector<8x32xf32> to vector<8x32xbf16>
    %12 = arith.truncf %9 : vector<8x32xf32> to vector<8x32xbf16>
    %13 = arith.truncf %10 : vector<8x32xf32> to vector<8x32xbf16>
    %14 = vector.extract_strided_slice %11 {offsets = [0, 0], sizes = [8, 8], strides = [1, 1]} : vector<8x32xbf16> to vector<8x8xbf16>
    %15 = vector.extract_strided_slice %11 {offsets = [0, 8], sizes = [8, 8], strides = [1, 1]} : vector<8x32xbf16> to vector<8x8xbf16>
    %16 = vector.extract_strided_slice %11 {offsets = [0, 16], sizes = [8, 8], strides = [1, 1]} : vector<8x32xbf16> to vector<8x8xbf16>
    %17 = vector.extract_strided_slice %11 {offsets = [0, 24], sizes = [8, 8], strides = [1, 1]} : vector<8x32xbf16> to vector<8x8xbf16>
    %18 = vector.shape_cast %14 : vector<8x8xbf16> to vector<1x8x8xbf16>
    %19 = vector.shape_cast %15 : vector<8x8xbf16> to vector<1x8x8xbf16>
    %20 = vector.shape_cast %16 : vector<8x8xbf16> to vector<1x8x8xbf16>
    %21 = vector.shape_cast %17 : vector<8x8xbf16> to vector<1x8x8xbf16>
    %22 = tpu.concatenate %18, %19, %20, %21 in 0 : vector<1x8x8xbf16>, vector<1x8x8xbf16>, vector<1x8x8xbf16>, vector<1x8x8xbf16> -> vector<4x8x8xbf16>
    %23 = vector.extract_strided_slice %12 {offsets = [0, 0], sizes = [8, 8], strides = [1, 1]} : vector<8x32xbf16> to vector<8x8xbf16>
    %24 = vector.extract_strided_slice %12 {offsets = [0, 8], sizes = [8, 8], strides = [1, 1]} : vector<8x32xbf16> to vector<8x8xbf16>
    %25 = vector.extract_strided_slice %12 {offsets = [0, 16], sizes = [8, 8], strides = [1, 1]} : vector<8x32xbf16> to vector<8x8xbf16>
    %26 = vector.extract_strided_slice %12 {offsets = [0, 24], sizes = [8, 8], strides = [1, 1]} : vector<8x32xbf16> to vector<8x8xbf16>
    %27 = vector.shape_cast %23 : vector<8x8xbf16> to vector<1x8x8xbf16>
    %28 = vector.shape_cast %24 : vector<8x8xbf16> to vector<1x8x8xbf16>
    %29 = vector.shape_cast %25 : vector<8x8xbf16> to vector<1x8x8xbf16>
    %30 = vector.shape_cast %26 : vector<8x8xbf16> to vector<1x8x8xbf16>
    %31 = tpu.concatenate %27, %28, %29, %30 in 0 : vector<1x8x8xbf16>, vector<1x8x8xbf16>, vector<1x8x8xbf16>, vector<1x8x8xbf16> -> vector<4x8x8xbf16>
    %32 = vector.extract_strided_slice %13 {offsets = [0, 0], sizes = [8, 8], strides = [1, 1]} : vector<8x32xbf16> to vector<8x8xbf16>
    %33 = vector.extract_strided_slice %13 {offsets = [0, 8], sizes = [8, 8], strides = [1, 1]} : vector<8x32xbf16> to vector<8x8xbf16>
    %34 = vector.extract_strided_slice %13 {offsets = [0, 16], sizes = [8, 8], strides = [1, 1]} : vector<8x32xbf16> to vector<8x8xbf16>
    %35 = vector.extract_strided_slice %13 {offsets = [0, 24], sizes = [8, 8], strides = [1, 1]} : vector<8x32xbf16> to vector<8x8xbf16>
    %36 = vector.shape_cast %32 : vector<8x8xbf16> to vector<1x8x8xbf16>
    %37 = vector.shape_cast %33 : vector<8x8xbf16> to vector<1x8x8xbf16>
    %38 = vector.shape_cast %34 : vector<8x8xbf16> to vector<1x8x8xbf16>
    %39 = vector.shape_cast %35 : vector<8x8xbf16> to vector<1x8x8xbf16>
    %40 = tpu.concatenate %36, %37, %38, %39 in 0 : vector<1x8x8xbf16>, vector<1x8x8xbf16>, vector<1x8x8xbf16>, vector<1x8x8xbf16> -> vector<4x8x8xbf16>
    %cst_6 = arith.constant 8.000000e+00 : f32
    %cst_7 = arith.constant -5.000000e-01 : f32
    %41 = math.powf %cst_6, %cst_7 : f32
    "tpu.trace_start"() <{level = 10 : i32, message = "hqd,hkd->hqk"}> : () -> ()
    %cst_8 = arith.constant dense<0.000000e+00> : vector<4x8x8xf32>
    %42 = tpu.matmul %22, %31, %cst_8 {dimension_numbers = #tpu.dot_dimension_numbers<[2], [2], [1], [1], [0, 0, 0, 1, 1, 1], [0], [0]>} : vector<4x8x8xbf16>, vector<4x8x8xbf16>, vector<4x8x8xf32> -> vector<4x8x8xf32>
    "tpu.trace_stop"() : () -> ()
    %43 = vector.broadcast %41 : f32 to vector<4x8x8xf32>
    %44 = arith.mulf %42, %43 : vector<4x8x8xf32>
    %45 = tpu.iota {dimensions = array<i32: 1>} : vector<4x8x8xi32>
    %46 = vector.broadcast %0 : i32 to vector<4x8x8xi32>
    %47 = arith.addi %46, %45 : vector<4x8x8xi32>
    %48 = tpu.iota {dimensions = array<i32: 2>} : vector<4x8x8xi32>
    %49 = arith.cmpi sge, %47, %48 : vector<4x8x8xi32>
    %cst_9 = arith.constant -1.000000e+30 : f32
    %50 = vector.broadcast %cst_9 : f32 to vector<4x8x8xf32>
    %51 = arith.select %49, %44, %50 : vector<4x8x8xi1>, vector<4x8x8xf32>
    %cst_10 = arith.constant dense<0xFF800000> : vector<4x8xf32>
    %52 = vector.multi_reduction <maximumf>, %51, %cst_10 [2] : vector<4x8x8xf32> to vector<4x8xf32>
    %53 = vector.shape_cast %52 : vector<4x8xf32> to vector<4x8x1xf32>
    %54 = vector.broadcast %53 : vector<4x8x1xf32> to vector<4x8x8xf32>
    %55 = arith.subf %51, %54 : vector<4x8x8xf32>
    %56 = math.exp %55 : vector<4x8x8xf32>
    %cst_11 = arith.constant dense<0.000000e+00> : vector<4x8xf32>
    %57 = vector.multi_reduction <add>, %56, %cst_11 [2] : vector<4x8x8xf32> to vector<4x8xf32>
    %58 = vector.shape_cast %57 : vector<4x8xf32> to vector<4x8x1xf32>
    %59 = tpu.reciprocal %58 {approx = true} : vector<4x8x1xf32> -> vector<4x8x1xf32>
    %60 = arith.truncf %56 : vector<4x8x8xf32> to vector<4x8x8xbf16>
    "tpu.trace_start"() <{level = 10 : i32, message = "hqk,hkd->hqd"}> : () -> ()
    %cst_12 = arith.constant dense<0.000000e+00> : vector<4x8x8xf32>
    %61 = tpu.matmul %60, %40, %cst_12 {dimension_numbers = #tpu.dot_dimension_numbers<[2], [1], [1], [2], [0, 0, 0, 1, 1, 2], [0], [0]>} : vector<4x8x8xbf16>, vector<4x8x8xbf16>, vector<4x8x8xf32> -> vector<4x8x8xf32>
    "tpu.trace_stop"() : () -> ()
    %62 = vector.broadcast %59 : vector<4x8x1xf32> to vector<4x8x8xf32>
    %63 = arith.mulf %61, %62 : vector<4x8x8xf32>
    %64 = vector.extract_strided_slice %63 {offsets = [0, 0, 0], sizes = [1, 8, 8], strides = [1, 1, 1]} : vector<4x8x8xf32> to vector<1x8x8xf32>
    %65 = vector.shape_cast %64 : vector<1x8x8xf32> to vector<8x8xf32>
    %66 = vector.extract_strided_slice %63 {offsets = [1, 0, 0], sizes = [1, 8, 8], strides = [1, 1, 1]} : vector<4x8x8xf32> to vector<1x8x8xf32>
    %67 = vector.shape_cast %66 : vector<1x8x8xf32> to vector<8x8xf32>
    %68 = vector.extract_strided_slice %63 {offsets = [2, 0, 0], sizes = [1, 8, 8], strides = [1, 1, 1]} : vector<4x8x8xf32> to vector<1x8x8xf32>
    %69 = vector.shape_cast %68 : vector<1x8x8xf32> to vector<8x8xf32>
    %70 = vector.extract_strided_slice %63 {offsets = [3, 0, 0], sizes = [1, 8, 8], strides = [1, 1, 1]} : vector<4x8x8xf32> to vector<1x8x8xf32>
    %71 = vector.shape_cast %70 : vector<1x8x8xf32> to vector<8x8xf32>
    %72 = tpu.concatenate %65, %67, %69, %71 in 1 : vector<8x8xf32>, vector<8x8xf32>, vector<8x8xf32>, vector<8x8xf32> -> vector<8x32xf32>
    %73 = arith.truncf %72 : vector<8x32xf32> to vector<8x32xbf16>
    %c0_13 = arith.constant 0 : index
    %c0_14 = arith.constant 0 : index
    %74 = vector.load %arg5[%c0_13, %c0_14] : memref<32x32xbf16, #tpu.memory_space<vmem>>, vector<32x32xbf16>
    %cst_15 = arith.constant dense<0.000000e+00> : vector<8x32xf32>
    %75 = tpu.matmul %73, %74, %cst_15 {dimension_numbers = #tpu.dot_dimension_numbers<[1], [0], [0], [1], [0, 0, 1, 1], [], []>} : vector<8x32xbf16>, vector<32x32xbf16>, vector<8x32xf32> -> vector<8x32xf32>
    %c0_16 = arith.constant 0 : index
    %c0_17 = arith.constant 0 : index
    %76 = vector.load %arg6[%c0_16, %c0_17] : memref<1x32xf32, #tpu.memory_space<vmem>>, vector<1x32xf32>
    %77 = vector.broadcast %76 : vector<1x32xf32> to vector<8x32xf32>
    %78 = arith.addf %75, %77 : vector<8x32xf32>
    %c0_18 = arith.constant 0 : index
    %c0_19 = arith.constant 0 : index
    %c0_20 = arith.constant 0 : index
    %79 = vector.load %arg7[%c0_18, %c0_19, %c0_20] : memref<1x8x32xf32, #tpu.memory_space<vmem>>, vector<1x8x32xf32>
    %80 = vector.shape_cast %79 : vector<1x8x32xf32> to vector<8x32xf32>
    %81 = vector.shape_cast %78 : vector<8x32xf32> to vector<1x8x32xf32>
    tpu.vector_store %arg7[%c0_18, %c0_19, %c0_20], %81 {strides = array<i32>} : memref<1x8x32xf32, #tpu.memory_space<vmem>>, vector<1x8x32xf32>,
    return
  }
  func.func @transform_0(%arg0: i32, %arg1: i32) -> (i32, i32, i32) {
    %c0_i32 = arith.constant 0 : i32
    %c0_i32_0 = arith.constant 0 : i32
    %c0_i32_1 = arith.constant 0 : i32
    return %arg0, %c0_i32, %c0_i32_0 : i32, i32, i32
  }
  func.func @transform_1(%arg0: i32, %arg1: i32) -> (i32, i32) {
    %c0_i32 = arith.constant 0 : i32
    %c0_i32_0 = arith.constant 0 : i32
    %c0_i32_1 = arith.constant 0 : i32
    return %c0_i32, %c0_i32_0 : i32, i32
  }
  func.func @transform_2(%arg0: i32, %arg1: i32) -> (i32, i32) {
    %c0_i32 = arith.constant 0 : i32
    %c0_i32_0 = arith.constant 0 : i32
    %c0_i32_1 = arith.constant 0 : i32
    return %c0_i32, %c0_i32_0 : i32, i32
  }
  func.func @transform_3(%arg0: i32, %arg1: i32) -> (i32, i32) {
    %c0_i32 = arith.constant 0 : i32
    %c0_i32_0 = arith.constant 0 : i32
    %c0_i32_1 = arith.constant 0 : i32
    return %c0_i32, %c0_i32_0 : i32, i32
  }
  func.func @transform_4(%arg0: i32, %arg1: i32) -> (i32, i32) {
    %c0_i32 = arith.constant 0 : i32
    %c0_i32_0 = arith.constant 0 : i32
    %c0_i32_1 = arith.constant 0 : i32
    return %c0_i32, %c0_i32_0 : i32, i32
  }
  func.func @transform_5(%arg0: i32, %arg1: i32) -> (i32, i32, i32) {
    %c0_i32 = arith.constant 0 : i32
    %c0_i32_0 = arith.constant 0 : i32
    return %arg0, %arg1, %c0_i32 : i32, i32, i32
  }
}

</mosaic_0001>

<llo_original>
// kernel: tpu_custom_call.1
$region0: #{tpu_custom_call.1}
  #allocation0 [shape = 'u32[]', space=smem, size = 0x4, offset = 0x4, fixed_abs, tag = 'smem constant byte address 0x4 - core index']
  #allocation1 [shape = 'u32[144,128]{1,0:T(1,128)}', space=vmem, size = 0x12000, scoped, tag = 'internal scratch']
  %s0 = inlined_call_operand.hbm [shape: bf16[2,8,32], index: 0, kind: input, shape index: {}]
  %s1 = inlined_call_operand.hbm [shape: bf16[32,96], index: 1, kind: input, shape index: {}]
  %s2 = inlined_call_operand.vmem [shape: f32[1,96], index: 2, kind: input, shape index: {}]
  %s3 = inlined_call_operand.hbm [shape: bf16[32,32], index: 3, kind: input, shape index: {}]
  %s4 = inlined_call_operand.vmem [shape: f32[1,32], index: 4, kind: input, shape index: {}]
  %s5 = inlined_call_operand.hbm [shape: f32[2,8,32], index: 5, kind: output, shape index: {}]
  %s6 = sld [smem:[#allocation0]]
  $region65: #{tpu_custom_call.1} parent=0
    _
  %s8 = ssub.s32 1, %s6
  %s9 = scalar_select 0, %s8, %s6
  $region1: #{tpu_custom_call.1} parent=0
    #allocation2 [shape = 'u8[4096]{0}', space=vmem, size = 0x1000, scoped, tag = 'input window, operand 0']
    #allocation3 [shape = 's32[2]{0}', space=sflag, size = 0x8, scoped, tag = 'scoped memory for tpu_custom_call.1']
    #allocation4 [shape = 's32[2]{0}', space=sflag, size = 0x8, scoped, tag = 'scoped memory for tpu_custom_call.1']
    #allocation5 [shape = 'u8[8192]{0}', space=vmem, size = 0x2000, scoped, tag = 'input window, operand 1, single buffered']
    #allocation6 [shape = 's32[1]{0}', space=sflag, size = 0x4, scoped, tag = 'scoped memory for tpu_custom_call.1']
    #allocation7 [shape = 'u8[8192]{0}', space=vmem, size = 0x2000, scoped, tag = 'input window, operand 3, single buffered']
    #allocation8 [shape = 'u8[8192]{0}', space=vmem, size = 0x2000, scoped, tag = 'output window, operand 0']
    %10 = vsyncpa [#allocation3], 0
    %s11 = scalar_lea.sflag [#allocation3], 1
    %12 = vsyncpa %s11, 0
    %13 = vsyncpa [#allocation6], 0
    %14 = vsyncpa [#allocation4], 0
    %s15 = scalar_lea.sflag [#allocation4], 1
    %16 = vsyncpa %s15, 0
    loop: start=0, step=1, limit=4
    $region2: #{tpu_custom_call.1} parent=1 // loop_pre_header
      _
    $region3: #{tpu_custom_call.1} parent=1 // loop_header
      %s18 = sphi 0, %s22
      %p19 = scmp.ge.s32.totalorder %s18, 4
      %s25 = sphi 0, %s37
      %s26 = sphi 0, %s33
      %s27 = sphi 0, %s25
      %s28 = sphi 0, %s26
      %s29 = sphi 0, %s27
      %s30 = sphi 0, %s28
      %s40 = sphi 0, %s42
      %s43 = sphi 0, %s40
      %s44 = sphi 0, %s43
      %s60 = sphi 0, %s44
      %s64 = sphi 0, %s64
      %s66 = sphi 0, %s64
      %s67 = sphi 0, %s66
      %s81 = sphi 0, %s67
      %s85 = sphi 0, %s85
      %s87 = sphi 0, %s85
      %s88 = sphi 0, %s87
      %s102 = sphi 0, %s88
      %s106 = sphi 0, %s106
      %s108 = sphi 0, %s106
      %s109 = sphi 0, %s108
      %s123 = sphi 0, %s109
      %s127 = sphi 0, %s127
      %s129 = sphi 0, %s127
      %s130 = sphi 0, %s129
      %s144 = sphi 0, %s130
      %s152 = sphi 0, %s154
      %s155 = sphi 0, %s152
      %s156 = sphi 0, %s155
      %s172 = sphi 0, %s156
    $region4: #{tpu_custom_call.1} parent=1 // loop_header_branch
      %21 = sbr.rel (%p19) target = $region8
    $region5: #{tpu_custom_call.1} parent=1 // loop_body
      %s23 = ssub.s32 %s18, 1
      %s24 = ssub.s32 %s18, 2
      %s31 = sadd.s32 1, %s26
      %p32 = scmp.ge.s32.totalorder %s31, 1
      %s33 = scalar_select %p32, 0, %s31
      %s34 = sadd.s32 1, %s25
      %s35 = scalar_select %p32, %s34, %s25
      %p36 = scmp.ge.s32.totalorder %s35, 2
      %s37 = scalar_select %p36, 0, %s35
      %s38 = ssub.s32 %s25, %s37
      %p39 = scmp.eq.s32.totalorder %s38, 0
      %s41 = sadd.s32 %s40, 1
      %s42 = scalar_select %p39, %s40, %s41
      %p45 = pneg %p39
      %p46 = scmp.eq.s32.totalorder %s18, 1
      %p47 = por %p45, %p46
      %p48 = scmp.ne.s32.totalorder %s40, %s43
      %p49 = scmp.eq.s32.totalorder %s18, 0
      %p50 = por %p48, %p49
      %p51 = scmp.ne.s32.totalorder %s40, %s43
      %p52 = scmp.eq.s32.totalorder %s23, 1
      %p53 = por %p51, %p52
      %p54 = scmp.ne.s32.totalorder %s43, %s44
      %p55 = scmp.eq.s32.totalorder %s23, 0
      %p56 = por %p54, %p55
      %p57 = scmp.ne.s32.totalorder %s43, %s44
      %p58 = scmp.eq.s32.totalorder %s24, 1
      %p59 = por %p57, %p58
      %p61 = scmp.ne.s32.totalorder %s44, %s60
      %p62 = scmp.eq.s32.totalorder %s24, 0
      %p63 = por %p61, %p62
      %s65 = sadd.s32 %s64, 1
      %p68 = scmp.eq.s32.totalorder %s18, 1
      %p69 = scmp.ne.s32.totalorder %s64, %s66
      %p70 = scmp.eq.s32.totalorder %s18, 0
      %p71 = por %p69, %p70
      %p72 = scmp.ne.s32.totalorder %s64, %s66
      %p73 = scmp.eq.s32.totalorder %s23, 1
      %p74 = por %p72, %p73
      %p75 = scmp.ne.s32.totalorder %s66, %s67
      %p76 = scmp.eq.s32.totalorder %s23, 0
      %p77 = por %p75, %p76
      %p78 = scmp.ne.s32.totalorder %s66, %s67
      %p79 = scmp.eq.s32.totalorder %s24, 1
      %p80 = por %p78, %p79
      %p82 = scmp.ne.s32.totalorder %s67, %s81
      %p83 = scmp.eq.s32.totalorder %s24, 0
      %p84 = por %p82, %p83
      %s86 = sadd.s32 %s85, 1
      %p89 = scmp.eq.s32.totalorder %s18, 1
      %p90 = scmp.ne.s32.totalorder %s85, %s87
      %p91 = scmp.eq.s32.totalorder %s18, 0
      %p92 = por %p90, %p91
      %p93 = scmp.ne.s32.totalorder %s85, %s87
      %p94 = scmp.eq.s32.totalorder %s23, 1
      %p95 = por %p93, %p94
      %p96 = scmp.ne.s32.totalorder %s87, %s88
      %p97 = scmp.eq.s32.totalorder %s23, 0
      %p98 = por %p96, %p97
      %p99 = scmp.ne.s32.totalorder %s87, %s88
      %p100 = scmp.eq.s32.totalorder %s24, 1
      %p101 = por %p99, %p100
      %p103 = scmp.ne.s32.totalorder %s88, %s102
      %p104 = scmp.eq.s32.totalorder %s24, 0
      %p105 = por %p103, %p104
      %s107 = sadd.s32 %s106, 1
      %p110 = scmp.eq.s32.totalorder %s18, 1
      %p111 = scmp.ne.s32.totalorder %s106, %s108
      %p112 = scmp.eq.s32.totalorder %s18, 0
      %p113 = por %p111, %p112
      %p114 = scmp.ne.s32.totalorder %s106, %s108
      %p115 = scmp.eq.s32.totalorder %s23, 1
      %p116 = por %p114, %p115
      %p117 = scmp.ne.s32.totalorder %s108, %s109
      %p118 = scmp.eq.s32.totalorder %s23, 0
      %p119 = por %p117, %p118
      %p120 = scmp.ne.s32.totalorder %s108, %s109
      %p121 = scmp.eq.s32.totalorder %s24, 1
      %p122 = por %p120, %p121
      %p124 = scmp.ne.s32.totalorder %s109, %s123
      %p125 = scmp.eq.s32.totalorder %s24, 0
      %p126 = por %p124, %p125
      %s128 = sadd.s32 %s127, 1
      %p131 = scmp.eq.s32.totalorder %s18, 1
      %p132 = scmp.ne.s32.totalorder %s127, %s129
      %p133 = scmp.eq.s32.totalorder %s18, 0
      %p134 = por %p132, %p133
      %p135 = scmp.ne.s32.totalorder %s127, %s129
      %p136 = scmp.eq.s32.totalorder %s23, 1
      %p137 = por %p135, %p136
      %p138 = scmp.ne.s32.totalorder %s129, %s130
      %p139 = scmp.eq.s32.totalorder %s23, 0
      %p140 = por %p138, %p139
      %p141 = scmp.ne.s32.totalorder %s129, %s130
      %p142 = scmp.eq.s32.totalorder %s24, 1
      %p143 = por %p141, %p142
      %p145 = scmp.ne.s32.totalorder %s130, %s144
      %p146 = scmp.eq.s32.totalorder %s24, 0
      %p147 = por %p145, %p146
      %s148 = ssub.s32 %s25, %s37
      %s149 = ssub.s32 %s26, %s33
      %s150 = sor.u32 %s148, %s149
      %p151 = scmp.eq.s32.totalorder %s150, 0
      %s153 = sadd.s32 %s152, 1
      %s154 = scalar_select %p151, %s152, %s153
      %p157 = pneg %p151
      %p158 = scmp.eq.s32.totalorder %s18, 1
      %p159 = por %p157, %p158
      %p160 = scmp.ne.s32.totalorder %s152, %s155
      %p161 = scmp.eq.s32.totalorder %s18, 0
      %p162 = por %p160, %p161
      %p163 = scmp.ne.s32.totalorder %s152, %s155
      %p164 = scmp.eq.s32.totalorder %s23, 1
      %p165 = por %p163, %p164
      %p166 = scmp.ne.s32.totalorder %s155, %s156
      %p167 = scmp.eq.s32.totalorder %s23, 0
      %p168 = por %p166, %p167
      %p169 = scmp.ne.s32.totalorder %s155, %s156
      %p170 = scmp.eq.s32.totalorder %s24, 1
      %p171 = por %p169, %p170
      %p173 = scmp.ne.s32.totalorder %s156, %s172
      %p174 = scmp.eq.s32.totalorder %s24, 0
      %p175 = por %p173, %p174
      %p176 = scmp.le.s32.totalorder 1, %s18
      %p177 = scmp.lt.s32.totalorder %s18, 3
      %p178 = pnand %p176, %p177
      %p179 = pneg %p178
      // Predicated region
      $region9: #{tpu_custom_call.1} parent=5 // pred_check
        _
      $region10: #{tpu_custom_call.1} parent=5 // pred_check_branch
        %181 = sbr.rel (%p178) target = $region12
      $region11: #{tpu_custom_call.1} parent=5 // pred_region
        %s182 = ssub.s32 %s18, 1
        // Predicated region
        $region13: #{tpu_custom_call.1} parent=11 // pred_check
          %p183 = pneg %p77
        $region14: #{tpu_custom_call.1} parent=11 // pred_check_branch
          %185 = sbr.rel (%p183) target = $region16
        $region15: #{tpu_custom_call.1} parent=11 // pred_region
          %s187 = ssub.s32 256, 256
          %188 = vsyncadd [#allocation6], %s187
          %s189 = sshll.u32 [#allocation5], 4
          %s190 = int_to_ptr.vmem [resolvable:$true] %s189
          %195 = dma.hbm_to_vmem [thread:$0]  %s1, 256, %s190, [#allocation6], 64, 64, 4
        $region16: #{tpu_custom_call.1} parent=11 // pred_fallthru
          _
        // Predicated region
        $region17: #{tpu_custom_call.1} parent=11 // pred_check
          %p196 = pneg %p98
        $region18: #{tpu_custom_call.1} parent=11 // pred_check_branch
          %198 = sbr.rel (%p196) target = $region20
        $region19: #{tpu_custom_call.1} parent=11 // pred_region
          _
        $region20: #{tpu_custom_call.1} parent=11 // pred_fallthru
          _
        // Predicated region
        $region21: #{tpu_custom_call.1} parent=11 // pred_check
          %p199 = pneg %p119
        $region22: #{tpu_custom_call.1} parent=11 // pred_check_branch
          %201 = sbr.rel (%p199) target = $region24
        $region23: #{tpu_custom_call.1} parent=11 // pred_region
          %s203 = ssub.s32 256, 256
          %204 = vsyncadd [#allocation6], %s203
          %s205 = sshll.u32 [#allocation7], 4
          %s206 = int_to_ptr.vmem [resolvable:$true] %s205
          %211 = dma.hbm_to_vmem [thread:$0]  %s3, 256, %s206, [#allocation6], 64, 64, 4
        $region24: #{tpu_custom_call.1} parent=11 // pred_fallthru
          _
        // Predicated region
        $region25: #{tpu_custom_call.1} parent=11 // pred_check
          %p212 = pneg %p140
        $region26: #{tpu_custom_call.1} parent=11 // pred_check_branch
          %214 = sbr.rel (%p212) target = $region28
        $region27: #{tpu_custom_call.1} parent=11 // pred_region
          _
        $region28: #{tpu_custom_call.1} parent=11 // pred_fallthru
          _
      $region12: #{tpu_custom_call.1} parent=5 // pred_fallthru
        _
      %p215 = scmp.lt.s32.totalorder %s18, 2
      // Predicated region
      $region29: #{tpu_custom_call.1} parent=5 // pred_check
        %p216 = pneg %p215
      $region30: #{tpu_custom_call.1} parent=5 // pred_check_branch
        %218 = sbr.rel (%p216) target = $region32
      $region31: #{tpu_custom_call.1} parent=5 // pred_region
        // Predicated region
        $region33: #{tpu_custom_call.1} parent=31 // pred_check
          %p219 = pneg %p50
        $region34: #{tpu_custom_call.1} parent=31 // pred_check_branch
          %221 = sbr.rel (%p219) target = $region36
        $region35: #{tpu_custom_call.1} parent=31 // pred_region
          %s222 = sand.u32 %s40, 1
          %s223 = scalar_lea.sflag [#allocation3], %s222
          %s224 = sand.u32 %s40, 1
          %s225 = smul.addr %s224, 4
          %s226 = scalar_lea.vmem [#allocation2], %s225
          %s228 = ssub.s32 64, 64
          %229 = vsyncadd %s223, %s228
          %s230 = smul.addr %s25, 64
          %s231 = scalar_lea.hbm %s0, %s230
          %s233 = sshll.u32 %s226, 4
          %s234 = int_to_ptr.vmem [resolvable:$true] %s233
          %236 = dma.hbm_to_vmem [thread:$0]  %s231, 64, %s234, %s223
        $region36: #{tpu_custom_call.1} parent=31 // pred_fallthru
          _
      $region32: #{tpu_custom_call.1} parent=5 // pred_fallthru
        _
      %p237 = scmp.le.s32.totalorder 1, %s18
      %p238 = scmp.lt.s32.totalorder %s18, 3
      %p239 = pnand %p237, %p238
      %p240 = pneg %p239
      // Predicated region
      $region37: #{tpu_custom_call.1} parent=5 // pred_check
        _
      $region38: #{tpu_custom_call.1} parent=5 // pred_check_branch
        %242 = sbr.rel (%p239) target = $region40
      $region39: #{tpu_custom_call.1} parent=5 // pred_region
        %s243 = ssub.s32 %s18, 1
        %s244 = sand.u32 %s43, 1
        %s245 = scalar_lea.sflag [#allocation3], %s244
        %s246 = sand.u32 %s43, 1
        %s247 = smul.addr %s246, 4
        %s248 = scalar_lea.vmem [#allocation2], %s247
        // Predicated region
        $region41: #{tpu_custom_call.1} parent=39 // pred_check
          %p249 = pneg %p56
        $region42: #{tpu_custom_call.1} parent=39 // pred_check_branch
          %251 = sbr.rel (%p249) target = $region44
        $region43: #{tpu_custom_call.1} parent=39 // pred_region
          %252 = dma.done %s245, 64
        $region44: #{tpu_custom_call.1} parent=39 // pred_fallthru
          _
        // Predicated region
        $region45: #{tpu_custom_call.1} parent=39 // pred_check
          %p253 = pneg %p77
        $region46: #{tpu_custom_call.1} parent=39 // pred_check_branch
          %255 = sbr.rel (%p253) target = $region48
        $region47: #{tpu_custom_call.1} parent=39 // pred_region
          %256 = dma.done [#allocation6], 256
        $region48: #{tpu_custom_call.1} parent=39 // pred_fallthru
          _
        // Predicated region
        $region49: #{tpu_custom_call.1} parent=39 // pred_check
          %p257 = pneg %p119
        $region50: #{tpu_custom_call.1} parent=39 // pred_check_branch
          %259 = sbr.rel (%p257) target = $region52
        $region51: #{tpu_custom_call.1} parent=39 // pred_region
          %260 = dma.done [#allocation6], 256
        $region52: #{tpu_custom_call.1} parent=39 // pred_fallthru
          _
        %s261 = sand.u32 %s43, 1
        %s262 = scalar_lea.sflag [#allocation3], %s261
        %s263 = sand.u32 %s43, 1
        %s264 = smul.addr %s263, 4
        %s265 = scalar_lea.vmem [#allocation2], %s264
        %p266 = pneg %p56
        %p267 = pneg %p53
        %p268 = pneg %p77
        %p269 = pneg %p74
        %p270 = pneg %p98
        %p271 = pneg %p95
        %p272 = pneg %p119
        %p273 = pneg %p116
        %p274 = pneg %p140
        %p275 = pneg %p137
        %p276 = pneg %p168
        %p277 = pneg %p165
        %s278 = sand.u32 %s155, 1
        %s279 = scalar_lea.sflag [#allocation4], %s278
        %s280 = sand.u32 %s155, 1
        %s281 = smul.addr %s280, 8
        %s282 = scalar_lea.vmem [#allocation8], %s281
        %s284 = smul.u32 %s28, 8
        %v285 = vld [vmem:[%s248] sm:$0xf]
        %v286 = vld [vmem:[#allocation5] sm:$0xf]
        %v287 = vld [vmem:[#allocation5 + $0x4] sm:$0xf]
        %v288 = vld [vmem:[#allocation5 + $0x8] sm:$0xf]
        %v289 = vld [vmem:[#allocation5 + $0xc] sm:$0xf]
        %v290 = vld [vmem:[%s2] sm:$0x1]
        %v292 = vlaneseq
        %v293 = vshrl.u32 %v292, 7
        %v294 = vsub.s32 0, %v293
        %v295 = vrot.slane %v290, %v294
        %v301 = vunpack.c.l.b16 %v286
        %v302 = vunpack.c.l.b16 %v287
        %v303 = vunpack.c.l.b16 %v288
        %v304 = vunpack.c.l.b16 %v289
        %v305 = vpack.c.b16 %v302, %v301
        %v306 = vpack.c.b16 %v304, %v303
        %vm309 = vcmask 261120
        %v311 = vsel %vm309, %v285, 0
        %313 = vmatprep.subr.bf16.mxu0 0
        %314 = vmatpush1.bf16.msra.mxu0 %v305
        %315 = vmatprep.subr.bf16.mxu0 0
        %316 = vmatpush1.bf16.msra.mxu0 %v306
        %317 = vmatprep.subr.bf16.mxu0 0
        %318 = vmatpush1.bf16.msra.mxu0 0
        %319 = vmatprep.subr.bf16.mxu0 0
        %320 = vmatpush1.bf16.msra.mxu0 0
        %321 = vmatprep.subr.bf16.mxu0 0
        %322 = vmatpush1.bf16.msra.mxu0 0
        %323 = vmatprep.subr.bf16.mxu0 0
        %324 = vmatpush1.bf16.msra.mxu0 0
        %325 = vmatprep.subr.bf16.mxu0 0
        %326 = vmatpush1.bf16.msra.mxu0 0
        %327 = vmatprep.subr.bf16.mxu0 0
        %328 = vmatpush1.bf16.msra.mxu0 0
        %329 = vmatprep.subr.bf16.mxu0 0
        %330 = vmatpush1.bf16.msra.mxu0 0
        %331 = vmatprep.subr.bf16.mxu0 0
        %332 = vmatpush1.bf16.msra.mxu0 0
        %333 = vmatprep.subr.bf16.mxu0 0
        %334 = vmatpush1.bf16.msra.mxu0 0
        %335 = vmatprep.subr.bf16.mxu0 0
        %336 = vmatpush1.bf16.msra.mxu0 0
        %337 = vmatprep.subr.bf16.mxu0 0
        %338 = vmatpush1.bf16.msra.mxu0 0
        %339 = vmatprep.subr.bf16.mxu0 0
        %340 = vmatpush1.bf16.msra.mxu0 0
        %341 = vmatprep.subr.bf16.mxu0 0
        %342 = vmatpush1.bf16.msra.mxu0 0
        %343 = vmatprep.subr.bf16.mxu0 0
        %344 = vmatpush1.bf16.msra.mxu0 0
        %345 = vmatprep.mubr.bf16.mxu0 0
        %346 = vmatmul.mubr.bf16.gmra.mrb[0].mxu0 %v311
        %v347 = vpop.f32.mrb[0].mxu0
        %v348 = vadd.f32 %v295, %v347
        %v349 = vpop.f32.mrb[0].mxu0
        %v350 = vpop.f32.mrb[0].mxu0
        %v351 = vpop.f32.mrb[0].mxu0
        %352 = vdwg.mxu0
        %v353 = vpack.c.bf16 %v348, %v348
        %355 = vrot.lane.b32.xlu0 %v353, 120
        %v356 = vpop.permute.xlu0 %355
        %357 = vrot.lane.b32.xlu0 %v353, 112
        %v358 = vpop.permute.xlu0 %357
        %359 = vrot.lane.b32.xlu0 %v353, 104
        %v360 = vpop.permute.xlu0 %359
        %361 = vrot.lane.b32.xlu0 %v353, 96
        %v362 = vpop.permute.xlu0 %361
        %vm363 = vcmask 64512
        %v365 = vsel %vm363, %v353, 0
        %v368 = vsel %vm363, %v362, 0
        %370 = vmatprep.subr.bf16.mxu0 0
        %371 = vmatpush1.bf16.xpose.msra.mxu0 %v368
        %372 = vmatprep.subr.bf16.mxu0 0
        %373 = vmatpush1.bf16.xpose.msra.mxu0 0
        %374 = vmatprep.subr.bf16.mxu0 0
        %375 = vmatpush1.bf16.xpose.msra.mxu0 0
        %376 = vmatprep.subr.bf16.mxu0 0
        %377 = vmatpush1.bf16.xpose.msra.mxu0 0
        %378 = vmatprep.subr.bf16.mxu0 0
        %379 = vmatpush1.bf16.xpose.msra.mxu0 0
        %380 = vmatprep.subr.bf16.mxu0 0
        %381 = vmatpush1.bf16.xpose.msra.mxu0 0
        %382 = vmatprep.subr.bf16.mxu0 0
        %383 = vmatpush1.bf16.xpose.msra.mxu0 0
        %384 = vmatprep.subr.bf16.mxu0 0
        %385 = vmatpush1.bf16.xpose.msra.mxu0 0
        %386 = vmatprep.subr.bf16.mxu0 0
        %387 = vmatpush1.bf16.xpose.msra.mxu0 0
        %388 = vmatprep.subr.bf16.mxu0 0
        %389 = vmatpush1.bf16.xpose.msra.mxu0 0
        %390 = vmatprep.subr.bf16.mxu0 0
        %391 = vmatpush1.bf16.xpose.msra.mxu0 0
        %392 = vmatprep.subr.bf16.mxu0 0
        %393 = vmatpush1.bf16.xpose.msra.mxu0 0
        %394 = vmatprep.subr.bf16.mxu0 0
        %395 = vmatpush1.bf16.xpose.msra.mxu0 0
        %396 = vmatprep.subr.bf16.mxu0 0
        %397 = vmatpush1.bf16.xpose.msra.mxu0 0
        %398 = vmatprep.subr.bf16.mxu0 0
        %399 = vmatpush1.bf16.xpose.msra.mxu0 0
        %400 = vmatprep.subr.bf16.mxu0 0
        %401 = vmatpush1.bf16.xpose.msra.mxu0 0
        %402 = vmatprep.mubr.bf16.mxu0 0
        %403 = vmatmul.mubr.bf16.gmra.mrb[0].mxu0 %v365
        %v404 = vpop.f32.mrb[0].mxu0
        %v405 = vadd.f32 0.0, %v404
        %v406 = vpop.f32.mrb[0].mxu0
        %v407 = vpop.f32.mrb[0].mxu0
        %v408 = vpop.f32.mrb[0].mxu0
        %409 = vdwg.mxu0
        %410 = vrot.lane.b32.xlu0 %v356, 96
        %v411 = vpop.permute.xlu0 %410
        %v413 = vsel %vm363, %v356, 0
        %v416 = vsel %vm363, %v411, 0
        %418 = vmatprep.subr.bf16.mxu0 0
        %419 = vmatpush1.bf16.xpose.msra.mxu0 %v416
        %420 = vmatprep.subr.bf16.mxu0 0
        %421 = vmatpush1.bf16.xpose.msra.mxu0 0
        %422 = vmatprep.subr.bf16.mxu0 0
        %423 = vmatpush1.bf16.xpose.msra.mxu0 0
        %424 = vmatprep.subr.bf16.mxu0 0
        %425 = vmatpush1.bf16.xpose.msra.mxu0 0
        %426 = vmatprep.subr.bf16.mxu0 0
        %427 = vmatpush1.bf16.xpose.msra.mxu0 0
        %428 = vmatprep.subr.bf16.mxu0 0
        %429 = vmatpush1.bf16.xpose.msra.mxu0 0
        %430 = vmatprep.subr.bf16.mxu0 0
        %431 = vmatpush1.bf16.xpose.msra.mxu0 0
        %432 = vmatprep.subr.bf16.mxu0 0
        %433 = vmatpush1.bf16.xpose.msra.mxu0 0
        %434 = vmatprep.subr.bf16.mxu0 0
        %435 = vmatpush1.bf16.xpose.msra.mxu0 0
        %436 = vmatprep.subr.bf16.mxu0 0
        %437 = vmatpush1.bf16.xpose.msra.mxu0 0
        %438 = vmatprep.subr.bf16.mxu0 0
        %439 = vmatpush1.bf16.xpose.msra.mxu0 0
        %440 = vmatprep.subr.bf16.mxu0 0
        %441 = vmatpush1.bf16.xpose.msra.mxu0 0
        %442 = vmatprep.subr.bf16.mxu0 0
        %443 = vmatpush1.bf16.xpose.msra.mxu0 0
        %444 = vmatprep.subr.bf16.mxu0 0
        %445 = vmatpush1.bf16.xpose.msra.mxu0 0
        %446 = vmatprep.subr.bf16.mxu0 0
        %447 = vmatpush1.bf16.xpose.msra.mxu0 0
        %448 = vmatprep.subr.bf16.mxu0 0
        %449 = vmatpush1.bf16.xpose.msra.mxu0 0
        %450 = vmatprep.mubr.bf16.mxu0 0
        %451 = vmatmul.mubr.bf16.gmra.mrb[0].mxu0 %v413
        %v452 = vpop.f32.mrb[0].mxu0
        %v453 = vadd.f32 0.0, %v452
        %v454 = vpop.f32.mrb[0].mxu0
        %v455 = vpop.f32.mrb[0].mxu0
        %v456 = vpop.f32.mrb[0].mxu0
        %457 = vdwg.mxu0
        %458 = vrot.lane.b32.xlu0 %v358, 96
        %v459 = vpop.permute.xlu0 %458
        %v461 = vsel %vm363, %v358, 0
        %v464 = vsel %vm363, %v459, 0
        %466 = vmatprep.subr.bf16.mxu0 0
        %467 = vmatpush1.bf16.xpose.msra.mxu0 %v464
        %468 = vmatprep.subr.bf16.mxu0 0
        %469 = vmatpush1.bf16.xpose.msra.mxu0 0
        %470 = vmatprep.subr.bf16.mxu0 0
        %471 = vmatpush1.bf16.xpose.msra.mxu0 0
        %472 = vmatprep.subr.bf16.mxu0 0
        %473 = vmatpush1.bf16.xpose.msra.mxu0 0
        %474 = vmatprep.subr.bf16.mxu0 0
        %475 = vmatpush1.bf16.xpose.msra.mxu0 0
        %476 = vmatprep.subr.bf16.mxu0 0
        %477 = vmatpush1.bf16.xpose.msra.mxu0 0
        %478 = vmatprep.subr.bf16.mxu0 0
        %479 = vmatpush1.bf16.xpose.msra.mxu0 0
        %480 = vmatprep.subr.bf16.mxu0 0
        %481 = vmatpush1.bf16.xpose.msra.mxu0 0
        %482 = vmatprep.subr.bf16.mxu0 0
        %483 = vmatpush1.bf16.xpose.msra.mxu0 0
        %484 = vmatprep.subr.bf16.mxu0 0
        %485 = vmatpush1.bf16.xpose.msra.mxu0 0
        %486 = vmatprep.subr.bf16.mxu0 0
        %487 = vmatpush1.bf16.xpose.msra.mxu0 0
        %488 = vmatprep.subr.bf16.mxu0 0
        %489 = vmatpush1.bf16.xpose.msra.mxu0 0
        %490 = vmatprep.subr.bf16.mxu0 0
        %491 = vmatpush1.bf16.xpose.msra.mxu0 0
        %492 = vmatprep.subr.bf16.mxu0 0
        %493 = vmatpush1.bf16.xpose.msra.mxu0 0
        %494 = vmatprep.subr.bf16.mxu0 0
        %495 = vmatpush1.bf16.xpose.msra.mxu0 0
        %496 = vmatprep.subr.bf16.mxu0 0
        %497 = vmatpush1.bf16.xpose.msra.mxu0 0
        %498 = vmatprep.mubr.bf16.mxu0 0
        %499 = vmatmul.mubr.bf16.gmra.mrb[0].mxu0 %v461
        %v500 = vpop.f32.mrb[0].mxu0
        %v501 = vadd.f32 0.0, %v500
        %v502 = vpop.f32.mrb[0].mxu0
        %v503 = vpop.f32.mrb[0].mxu0
        %v504 = vpop.f32.mrb[0].mxu0
        %505 = vdwg.mxu0
        %506 = vrot.lane.b32.xlu0 %v360, 96
        %v507 = vpop.permute.xlu0 %506
        %v509 = vsel %vm363, %v360, 0
        %v512 = vsel %vm363, %v507, 0
        %514 = vmatprep.subr.bf16.mxu0 0
        %515 = vmatpush1.bf16.xpose.msra.mxu0 %v512
        %516 = vmatprep.subr.bf16.mxu0 0
        %517 = vmatpush1.bf16.xpose.msra.mxu0 0
        %518 = vmatprep.subr.bf16.mxu0 0
        %519 = vmatpush1.bf16.xpose.msra.mxu0 0
        %520 = vmatprep.subr.bf16.mxu0 0
        %521 = vmatpush1.bf16.xpose.msra.mxu0 0
        %522 = vmatprep.subr.bf16.mxu0 0
        %523 = vmatpush1.bf16.xpose.msra.mxu0 0
        %524 = vmatprep.subr.bf16.mxu0 0
        %525 = vmatpush1.bf16.xpose.msra.mxu0 0
        %526 = vmatprep.subr.bf16.mxu0 0
        %527 = vmatpush1.bf16.xpose.msra.mxu0 0
        %528 = vmatprep.subr.bf16.mxu0 0
        %529 = vmatpush1.bf16.xpose.msra.mxu0 0
        %530 = vmatprep.subr.bf16.mxu0 0
        %531 = vmatpush1.bf16.xpose.msra.mxu0 0
        %532 = vmatprep.subr.bf16.mxu0 0
        %533 = vmatpush1.bf16.xpose.msra.mxu0 0
        %534 = vmatprep.subr.bf16.mxu0 0
        %535 = vmatpush1.bf16.xpose.msra.mxu0 0
        %536 = vmatprep.subr.bf16.mxu0 0
        %537 = vmatpush1.bf16.xpose.msra.mxu0 0
        %538 = vmatprep.subr.bf16.mxu0 0
        %539 = vmatpush1.bf16.xpose.msra.mxu0 0
        %540 = vmatprep.subr.bf16.mxu0 0
        %541 = vmatpush1.bf16.xpose.msra.mxu0 0
        %542 = vmatprep.subr.bf16.mxu0 0
        %543 = vmatpush1.bf16.xpose.msra.mxu0 0
        %544 = vmatprep.subr.bf16.mxu0 0
        %545 = vmatpush1.bf16.xpose.msra.mxu0 0
        %546 = vmatprep.mubr.bf16.mxu0 0
        %547 = vmatmul.mubr.bf16.gmra.mrb[0].mxu0 %v509
        %v548 = vpop.f32.mrb[0].mxu0
        %v549 = vadd.f32 0.0, %v548
        %v550 = vpop.f32.mrb[0].mxu0
        %v551 = vpop.f32.mrb[0].mxu0
        %v552 = vpop.f32.mrb[0].mxu0
        %553 = vdwg.mxu0
        %v554 = vmul.f32 %v405, 0.35355338
        %v555 = vmul.f32 %v453, 0.35355338
        %v556 = vmul.f32 %v501, 0.35355338
        %v557 = vmul.f32 %v549, 0.35355338
        %v558 = vlaneseq
        %v559 = vshrl.u32 %v558, 7
        %v560 = vstv %s284
        %v561 = vadd.s32 %v560, %v559
        %v562 = vlaneseq
        %v563 = vand.u32 %v562, 127
        %vm564 = vcmp.ge.s32.totalorder %v561, %v563
        %v565 = vsel %vm564, %v554, -1e+30
        %v566 = vsel %vm564, %v555, -1e+30
        %v567 = vsel %vm564, %v556, -1e+30
        %v568 = vsel %vm564, %v557, -1e+30
        %v569 = vsel %vm363, %v565, -inf
        %570 = vmax.xlane.f32.xlu0 %v569
        %v571 = vpop.xlane.xlu0 %570
        %v572 = vsel %vm363, %v566, -inf
        %573 = vmax.xlane.f32.xlu0 %v572
        %v574 = vpop.xlane.xlu0 %573
        %v575 = vsel %vm363, %v567, -inf
        %576 = vmax.xlane.f32.xlu0 %v575
        %v577 = vpop.xlane.xlu0 %576
        %v578 = vsel %vm363, %v568, -inf
        %579 = vmax.xlane.f32.xlu0 %v578
        %v580 = vpop.xlane.xlu0 %579
        %v581 = vsub.f32 %v565, %v571
        %v582 = vsub.f32 %v566, %v574
        %v583 = vsub.f32 %v567, %v577
        %v584 = vsub.f32 %v568, %v580
        %v585 = vmul.f32 %v581, 1.442695
        %v586 = vpow.pop %v585
        %v587 = vmul.f32 %v582, 1.442695
        %v588 = vpow.pop %v587
        %v589 = vmul.f32 %v583, 1.442695
        %v590 = vpow.pop %v589
        %v591 = vmul.f32 %v584, 1.442695
        %v592 = vpow.pop %v591
        %v593 = vsel %vm363, %v586, 0.0
        %594 = vadd.xlane.f32.xlu0 %v593
        %v595 = vpop.xlane.xlu0 %594
        %v596 = vsel %vm363, %v588, 0.0
        %597 = vadd.xlane.f32.xlu0 %v596
        %v598 = vpop.xlane.xlu0 %597
        %v599 = vsel %vm363, %v590, 0.0
        %600 = vadd.xlane.f32.xlu0 %v599
        %v601 = vpop.xlane.xlu0 %600
        %v602 = vsel %vm363, %v592, 0.0
        %603 = vadd.xlane.f32.xlu0 %v602
        %v604 = vpop.xlane.xlu0 %603
        %v605 = vrcp.pop %v595
        %v606 = vrcp.pop %v598
        %v607 = vrcp.pop %v601
        %v608 = vrcp.pop %v604
        %v609 = vpack.c.bf16 %v586, %v586
        %v610 = vpack.c.bf16 %v588, %v588
        %v611 = vpack.c.bf16 %v590, %v590
        %v612 = vpack.c.bf16 %v592, %v592
        %613 = vrot.lane.b32.xlu0 %v353, 64
        %v614 = vpop.permute.xlu0 %613
        %v616 = vsel %vm363, %v609, 0
        %vm618 = vcmask 1043456
        %v620 = vsel %vm618, %v614, 0
        %622 = vmatprep.subr.bf16.mxu0 0
        %623 = vmatpush1.bf16.msra.mxu0 %v620
        %624 = vmatprep.subr.bf16.mxu0 0
        %625 = vmatpush1.bf16.msra.mxu0 0
        %626 = vmatprep.subr.bf16.mxu0 0
        %627 = vmatpush1.bf16.msra.mxu0 0
        %628 = vmatprep.subr.bf16.mxu0 0
        %629 = vmatpush1.bf16.msra.mxu0 0
        %630 = vmatprep.subr.bf16.mxu0 0
        %631 = vmatpush1.bf16.msra.mxu0 0
        %632 = vmatprep.subr.bf16.mxu0 0
        %633 = vmatpush1.bf16.msra.mxu0 0
        %634 = vmatprep.subr.bf16.mxu0 0
        %635 = vmatpush1.bf16.msra.mxu0 0
        %636 = vmatprep.subr.bf16.mxu0 0
        %637 = vmatpush1.bf16.msra.mxu0 0
        %638 = vmatprep.subr.bf16.mxu0 0
        %639 = vmatpush1.bf16.msra.mxu0 0
        %640 = vmatprep.subr.bf16.mxu0 0
        %641 = vmatpush1.bf16.msra.mxu0 0
        %642 = vmatprep.subr.bf16.mxu0 0
        %643 = vmatpush1.bf16.msra.mxu0 0
        %644 = vmatprep.subr.bf16.mxu0 0
        %645 = vmatpush1.bf16.msra.mxu0 0
        %646 = vmatprep.subr.bf16.mxu0 0
        %647 = vmatpush1.bf16.msra.mxu0 0
        %648 = vmatprep.subr.bf16.mxu0 0
        %649 = vmatpush1.bf16.msra.mxu0 0
        %650 = vmatprep.subr.bf16.mxu0 0
        %651 = vmatpush1.bf16.msra.mxu0 0
        %652 = vmatprep.subr.bf16.mxu0 0
        %653 = vmatpush1.bf16.msra.mxu0 0
        %654 = vmatprep.mubr.bf16.mxu0 0
        %655 = vmatmul.mubr.bf16.gmra.mrb[0].mxu0 %v616
        %v656 = vpop.f32.mrb[0].mxu0
        %v657 = vadd.f32 0.0, %v656
        %v658 = vpop.f32.mrb[0].mxu0
        %v659 = vpop.f32.mrb[0].mxu0
        %v660 = vpop.f32.mrb[0].mxu0
        %661 = vdwg.mxu0
        %662 = vrot.lane.b32.xlu0 %v356, 64
        %v663 = vpop.permute.xlu0 %662
        %v665 = vsel %vm363, %v610, 0
        %v668 = vsel %vm618, %v663, 0
        %670 = vmatprep.subr.bf16.mxu0 0
        %671 = vmatpush1.bf16.msra.mxu0 %v668
        %672 = vmatprep.subr.bf16.mxu0 0
        %673 = vmatpush1.bf16.msra.mxu0 0
        %674 = vmatprep.subr.bf16.mxu0 0
        %675 = vmatpush1.bf16.msra.mxu0 0
        %676 = vmatprep.subr.bf16.mxu0 0
        %677 = vmatpush1.bf16.msra.mxu0 0
        %678 = vmatprep.subr.bf16.mxu0 0
        %679 = vmatpush1.bf16.msra.mxu0 0
        %680 = vmatprep.subr.bf16.mxu0 0
        %681 = vmatpush1.bf16.msra.mxu0 0
        %682 = vmatprep.subr.bf16.mxu0 0
        %683 = vmatpush1.bf16.msra.mxu0 0
        %684 = vmatprep.subr.bf16.mxu0 0
        %685 = vmatpush1.bf16.msra.mxu0 0
        %686 = vmatprep.subr.bf16.mxu0 0
        %687 = vmatpush1.bf16.msra.mxu0 0
        %688 = vmatprep.subr.bf16.mxu0 0
        %689 = vmatpush1.bf16.msra.mxu0 0
        %690 = vmatprep.subr.bf16.mxu0 0
        %691 = vmatpush1.bf16.msra.mxu0 0
        %692 = vmatprep.subr.bf16.mxu0 0
        %693 = vmatpush1.bf16.msra.mxu0 0
        %694 = vmatprep.subr.bf16.mxu0 0
        %695 = vmatpush1.bf16.msra.mxu0 0
        %696 = vmatprep.subr.bf16.mxu0 0
        %697 = vmatpush1.bf16.msra.mxu0 0
        %698 = vmatprep.subr.bf16.mxu0 0
        %699 = vmatpush1.bf16.msra.mxu0 0
        %700 = vmatprep.subr.bf16.mxu0 0
        %701 = vmatpush1.bf16.msra.mxu0 0
        %702 = vmatprep.mubr.bf16.mxu0 0
        %703 = vmatmul.mubr.bf16.gmra.mrb[0].mxu0 %v665
        %v704 = vpop.f32.mrb[0].mxu0
        %v705 = vadd.f32 0.0, %v704
        %v706 = vpop.f32.mrb[0].mxu0
        %v707 = vpop.f32.mrb[0].mxu0
        %v708 = vpop.f32.mrb[0].mxu0
        %709 = vdwg.mxu0
        %710 = vrot.lane.b32.xlu0 %v358, 64
        %v711 = vpop.permute.xlu0 %710
        %v713 = vsel %vm363, %v611, 0
        %v716 = vsel %vm618, %v711, 0
        %718 = vmatprep.subr.bf16.mxu0 0
        %719 = vmatpush1.bf16.msra.mxu0 %v716
        %720 = vmatprep.subr.bf16.mxu0 0
        %721 = vmatpush1.bf16.msra.mxu0 0
        %722 = vmatprep.subr.bf16.mxu0 0
        %723 = vmatpush1.bf16.msra.mxu0 0
        %724 = vmatprep.subr.bf16.mxu0 0
        %725 = vmatpush1.bf16.msra.mxu0 0
        %726 = vmatprep.subr.bf16.mxu0 0
        %727 = vmatpush1.bf16.msra.mxu0 0
        %728 = vmatprep.subr.bf16.mxu0 0
        %729 = vmatpush1.bf16.msra.mxu0 0
        %730 = vmatprep.subr.bf16.mxu0 0
        %731 = vmatpush1.bf16.msra.mxu0 0
        %732 = vmatprep.subr.bf16.mxu0 0
        %733 = vmatpush1.bf16.msra.mxu0 0
        %734 = vmatprep.subr.bf16.mxu0 0
        %735 = vmatpush1.bf16.msra.mxu0 0
        %736 = vmatprep.subr.bf16.mxu0 0
        %737 = vmatpush1.bf16.msra.mxu0 0
        %738 = vmatprep.subr.bf16.mxu0 0
        %739 = vmatpush1.bf16.msra.mxu0 0
        %740 = vmatprep.subr.bf16.mxu0 0
        %741 = vmatpush1.bf16.msra.mxu0 0
        %742 = vmatprep.subr.bf16.mxu0 0
        %743 = vmatpush1.bf16.msra.mxu0 0
        %744 = vmatprep.subr.bf16.mxu0 0
        %745 = vmatpush1.bf16.msra.mxu0 0
        %746 = vmatprep.subr.bf16.mxu0 0
        %747 = vmatpush1.bf16.msra.mxu0 0
        %748 = vmatprep.subr.bf16.mxu0 0
        %749 = vmatpush1.bf16.msra.mxu0 0
        %750 = vmatprep.mubr.bf16.mxu0 0
        %751 = vmatmul.mubr.bf16.gmra.mrb[0].mxu0 %v713
        %v752 = vpop.f32.mrb[0].mxu0
        %v753 = vadd.f32 0.0, %v752
        %v754 = vpop.f32.mrb[0].mxu0
        %v755 = vpop.f32.mrb[0].mxu0
        %v756 = vpop.f32.mrb[0].mxu0
        %757 = vdwg.mxu0
        %758 = vrot.lane.b32.xlu0 %v360, 64
        %v759 = vpop.permute.xlu0 %758
        %v761 = vsel %vm363, %v612, 0
        %v764 = vsel %vm618, %v759, 0
        %766 = vmatprep.subr.bf16.mxu0 0
        %767 = vmatpush1.bf16.msra.mxu0 %v764
        %768 = vmatprep.subr.bf16.mxu0 0
        %769 = vmatpush1.bf16.msra.mxu0 0
        %770 = vmatprep.subr.bf16.mxu0 0
        %771 = vmatpush1.bf16.msra.mxu0 0
        %772 = vmatprep.subr.bf16.mxu0 0
        %773 = vmatpush1.bf16.msra.mxu0 0
        %774 = vmatprep.subr.bf16.mxu0 0
        %775 = vmatpush1.bf16.msra.mxu0 0
        %776 = vmatprep.subr.bf16.mxu0 0
        %777 = vmatpush1.bf16.msra.mxu0 0
        %778 = vmatprep.subr.bf16.mxu0 0
        %779 = vmatpush1.bf16.msra.mxu0 0
        %780 = vmatprep.subr.bf16.mxu0 0
        %781 = vmatpush1.bf16.msra.mxu0 0
        %782 = vmatprep.subr.bf16.mxu0 0
        %783 = vmatpush1.bf16.msra.mxu0 0
        %784 = vmatprep.subr.bf16.mxu0 0
        %785 = vmatpush1.bf16.msra.mxu0 0
        %786 = vmatprep.subr.bf16.mxu0 0
        %787 = vmatpush1.bf16.msra.mxu0 0
        %788 = vmatprep.subr.bf16.mxu0 0
        %789 = vmatpush1.bf16.msra.mxu0 0
        %790 = vmatprep.subr.bf16.mxu0 0
        %791 = vmatpush1.bf16.msra.mxu0 0
        %792 = vmatprep.subr.bf16.mxu0 0
        %793 = vmatpush1.bf16.msra.mxu0 0
        %794 = vmatprep.subr.bf16.mxu0 0
        %795 = vmatpush1.bf16.msra.mxu0 0
        %796 = vmatprep.subr.bf16.mxu0 0
        %797 = vmatpush1.bf16.msra.mxu0 0
        %798 = vmatprep.mubr.bf16.mxu0 0
        %799 = vmatmul.mubr.bf16.gmra.mrb[0].mxu0 %v761
        %v800 = vpop.f32.mrb[0].mxu0
        %v801 = vadd.f32 0.0, %v800
        %v802 = vpop.f32.mrb[0].mxu0
        %v803 = vpop.f32.mrb[0].mxu0
        %v804 = vpop.f32.mrb[0].mxu0
        %805 = vdwg.mxu0
        %v806 = vmul.f32 %v657, %v605
        %v807 = vmul.f32 %v705, %v606
        %v808 = vmul.f32 %v753, %v607
        %v809 = vmul.f32 %v801, %v608
        %811 = vrot.lane.b32.xlu0 %v807, 8
        %v812 = vpop.permute.xlu0 %811
        %815 = vrot.lane.b32.xlu0 %v808, 16
        %v816 = vpop.permute.xlu0 %815
        %819 = vrot.lane.b32.xlu0 %v809, 24
        %v820 = vpop.permute.xlu0 %819
        %v822 = vsel %vm363, %v806, %v812
        %vm823 = vcmask 130048
        %v824 = vsel %vm823, %v822, %v816
        %vm825 = vcmask 195584
        %v826 = vsel %vm825, %v824, %v820
        %v827 = vpack.c.bf16 %v826, %v826
        %v828 = vld [vmem:[#allocation7] sm:$0xf]
        %v829 = vld [vmem:[#allocation7 + $0x4] sm:$0xf]
        %v830 = vld [vmem:[#allocation7 + $0x8] sm:$0xf]
        %v831 = vld [vmem:[#allocation7 + $0xc] sm:$0xf]
        %v832 = vld [vmem:[%s4] sm:$0x1]
        %v834 = vlaneseq
        %v835 = vshrl.u32 %v834, 7
        %v836 = vsub.s32 0, %v835
        %v837 = vrot.slane %v832, %v836
        %v843 = vunpack.c.l.b16 %v828
        %v844 = vunpack.c.l.b16 %v829
        %v845 = vunpack.c.l.b16 %v830
        %v846 = vunpack.c.l.b16 %v831
        %v847 = vpack.c.b16 %v844, %v843
        %v848 = vpack.c.b16 %v846, %v845
        %v852 = vsel %vm309, %v827, 0
        %854 = vmatprep.subr.bf16.mxu0 0
        %855 = vmatpush1.bf16.msra.mxu0 %v847
        %856 = vmatprep.subr.bf16.mxu0 0
        %857 = vmatpush1.bf16.msra.mxu0 %v848
        %858 = vmatprep.subr.bf16.mxu0 0
        %859 = vmatpush1.bf16.msra.mxu0 0
        %860 = vmatprep.subr.bf16.mxu0 0
        %861 = vmatpush1.bf16.msra.mxu0 0
        %862 = vmatprep.subr.bf16.mxu0 0
        %863 = vmatpush1.bf16.msra.mxu0 0
        %864 = vmatprep.subr.bf16.mxu0 0
        %865 = vmatpush1.bf16.msra.mxu0 0
        %866 = vmatprep.subr.bf16.mxu0 0
        %867 = vmatpush1.bf16.msra.mxu0 0
        %868 = vmatprep.subr.bf16.mxu0 0
        %869 = vmatpush1.bf16.msra.mxu0 0
        %870 = vmatprep.subr.bf16.mxu0 0
        %871 = vmatpush1.bf16.msra.mxu0 0
        %872 = vmatprep.subr.bf16.mxu0 0
        %873 = vmatpush1.bf16.msra.mxu0 0
        %874 = vmatprep.subr.bf16.mxu0 0
        %875 = vmatpush1.bf16.msra.mxu0 0
        %876 = vmatprep.subr.bf16.mxu0 0
        %877 = vmatpush1.bf16.msra.mxu0 0
        %878 = vmatprep.subr.bf16.mxu0 0
        %879 = vmatpush1.bf16.msra.mxu0 0
        %880 = vmatprep.subr.bf16.mxu0 0
        %881 = vmatpush1.bf16.msra.mxu0 0
        %882 = vmatprep.subr.bf16.mxu0 0
        %883 = vmatpush1.bf16.msra.mxu0 0
        %884 = vmatprep.subr.bf16.mxu0 0
        %885 = vmatpush1.bf16.msra.mxu0 0
        %886 = vmatprep.mubr.bf16.mxu0 0
        %887 = vmatmul.mubr.bf16.gmra.mrb[0].mxu0 %v852
        %v888 = vpop.f32.mrb[0].mxu0
        %v889 = vadd.f32 %v837, %v888
        %v890 = vpop.f32.mrb[0].mxu0
        %v891 = vpop.f32.mrb[0].mxu0
        %v892 = vpop.f32.mrb[0].mxu0
        %893 = vdwg.mxu0
        %894 = vst.msk [vmem:[%s282] sm:$0xff] %vm309, %v889
        %s895 = sand.u32 %s155, 1
        %s896 = scalar_lea.sflag [#allocation4], %s895
        %s897 = sand.u32 %s155, 1
        %s898 = smul.addr %s897, 8
        %s899 = scalar_lea.vmem [#allocation8], %s898
        // Predicated region
        $region53: #{tpu_custom_call.1} parent=39 // pred_check
          %p900 = pneg %p165
        $region54: #{tpu_custom_call.1} parent=39 // pred_check_branch
          %902 = sbr.rel (%p900) target = $region56
        $region55: #{tpu_custom_call.1} parent=39 // pred_region
          %s904 = ssub.s32 128, 128
          %905 = vsyncadd %s896, %s904
          %s906 = sadd.s32 %s28, %s27
          %s907 = smul.addr %s906, 128
          %s908 = scalar_lea.hbm %s5, %s907
          %s910 = sshll.u32 %s899, 4
          %s911 = int_to_ptr.vmem [resolvable:$true] %s910
          %913 = dma.vmem_to_hbm [thread:$0]  %s911, 128, %s908, %s896
        $region56: #{tpu_custom_call.1} parent=39 // pred_fallthru
          _
      $region40: #{tpu_custom_call.1} parent=5 // pred_fallthru
        _
      %p914 = scmp.le.s32.totalorder 2, %s18
      // Predicated region
      $region57: #{tpu_custom_call.1} parent=5 // pred_check
        %p915 = pneg %p914
      $region58: #{tpu_custom_call.1} parent=5 // pred_check_branch
        %917 = sbr.rel (%p915) target = $region60
      $region59: #{tpu_custom_call.1} parent=5 // pred_region
        %s918 = ssub.s32 %s18, 2
        // Predicated region
        $region61: #{tpu_custom_call.1} parent=59 // pred_check
          %p919 = pneg %p171
        $region62: #{tpu_custom_call.1} parent=59 // pred_check_branch
          %921 = sbr.rel (%p919) target = $region64
        $region63: #{tpu_custom_call.1} parent=59 // pred_region
          %s922 = sand.u32 %s156, 1
          %s923 = scalar_lea.sflag [#allocation4], %s922
          %s924 = sand.u32 %s156, 1
          %s925 = smul.addr %s924, 8
          %s926 = scalar_lea.vmem [#allocation8], %s925
          %927 = dma.done %s923, 128
        $region64: #{tpu_custom_call.1} parent=59 // pred_fallthru
          _
      $region60: #{tpu_custom_call.1} parent=5 // pred_fallthru
        _
    $region6: #{tpu_custom_call.1} parent=1 // loop_footer
      %s22 = sadd.s32 1, %s18
    $region7: #{tpu_custom_call.1} parent=1 // loop_footer_branch
      %17 = sbr.rel target = $region3
    $region8: #{tpu_custom_call.1} parent=1 // loop_exit
      _
    %928 = vsyncpa [#allocation3], 1
    %s929 = scalar_lea.sflag [#allocation3], 1
    %930 = vsyncpa %s929, 1
    %931 = vsyncpa [#allocation6], 1
    %932 = vsyncpa [#allocation4], 1
    %s933 = scalar_lea.sflag [#allocation4], 1
    %934 = vsyncpa %s933, 1

</llo_original>
